<compile_context>
chip_gen: v7x
topology: tpu7x:2x2x1
jax: 0.10.0
libtpu: 0.0.40
codegen_flags: <defaults>
</compile_context>

<pallas_src>
import functools
import math

import jax
import jax.numpy as jnp
from jax.experimental import pallas as pl
from jax.experimental.pallas import tpu as pltpu

_INPUT_BLOCK_BYTES = 4 * 1024 * 1024  # per-block budget (x2 for double-buffering)


def _pick_tile(n, max_tile, multiple):
    """Largest divisor of n that is <= max_tile and a multiple of `multiple`.

    Falls back to the full dimension n (always legal for the (8,128) rule) if
    no suitable divisor exists.
    """
    if n <= max_tile:
        return n
    best = 0
    i = 1
    while i * i <= n:
        if n % i == 0:
            for d in (i, n // i):
                if d <= max_tile and d % multiple == 0 and d > best:
                    best = d
        i += 1
    return best if best else n


def _sum_mid_kernel(x_ref, o_ref, acc_ref):
    # x_ref: (tile_pre, tile_red, tile_post); reduce the middle (red) axis.
    k = pl.program_id(2)

    @pl.when(k == 0)
    def _init():
        acc_ref[...] = jnp.zeros_like(acc_ref)

    acc_ref[...] += jnp.sum(x_ref[...].astype(acc_ref.dtype), axis=1)

    @pl.when(k == pl.num_programs(2) - 1)
    def _finalize():
        o_ref[...] = acc_ref[...].astype(o_ref.dtype)


def _sum_last_kernel(x_ref, o_ref, acc_ref):
    # x_ref: (tile_pre, tile_red); reduce the lane (last) axis.
    k = pl.program_id(1)

    @pl.when(k == 0)
    def _init():
        acc_ref[...] = jnp.zeros_like(acc_ref)

    acc_ref[...] += jnp.sum(x_ref[...].astype(acc_ref.dtype), axis=1, keepdims=True)

    @pl.when(k == pl.num_programs(1) - 1)
    def _finalize():
        o_ref[...] = acc_ref[...].astype(o_ref.dtype)


@functools.partial(jax.jit, static_argnames=("dim",))
def pallas_sum(x, dim):
    """torch.sum(x, dim) semantics (single int dim, keepdim=False)."""
    ndim = x.ndim
    d = dim % ndim  # handle negative dims like torch

    shape = x.shape
    pre = math.prod(shape[:d])
    red = shape[d]
    post = math.prod(shape[d + 1:])
    out_shape = shape[:d] + shape[d + 1:]

    if jnp.issubdtype(x.dtype, jnp.floating):
        acc_dtype = jnp.float32          # wide accumulation for bf16/fp16 inputs
        out_dtype = x.dtype
    else:
        # TODO(synk): torch.sum promotes integer/bool inputs to int64; JAX
        # defaults to 32-bit so we accumulate/return int32 here.
        acc_dtype = jnp.int32
        out_dtype = jnp.int32

    itemsize = jnp.dtype(x.dtype).itemsize
    pack = {1: 32, 2: 16}.get(itemsize, 8)  # sublane packing for the reduced axis
    budget_elems = max(1, _INPUT_BLOCK_BYTES // itemsize)

    compiler_params_2d = pltpu.CompilerParams(
        dimension_semantics=("parallel", "arbitrary"),
        vmem_limit_bytes=32 << 20,
    )
    compiler_params_3d = pltpu.CompilerParams(
        dimension_semantics=("parallel", "parallel", "arbitrary"),
        vmem_limit_bytes=32 << 20,
    )

    if post == 1:
        # ---- reduce over the LAST axis: 2-D (pre, red), lanes = red ----
        x2 = x.reshape(pre, red)
        tile_red = red if red <= 2048 else _pick_tile(red, 2048, 128)
        max_pre = max(1, budget_elems // tile_red)
        tile_pre = _pick_tile(pre, max_pre, 8)

        grid = (pre // tile_pre, red // tile_red)
        out2 = pl.pallas_call(
            _sum_last_kernel,
            out_shape=jax.ShapeDtypeStruct((pre, 1), out_dtype),
            grid=grid,
            in_specs=[pl.BlockSpec((tile_pre, tile_red), lambda i, k: (i, k))],
            out_specs=pl.BlockSpec((tile_pre, 1), lambda i, k: (i, 0)),
            scratch_shapes=[pltpu.VMEM((tile_pre, 1), acc_dtype)],
            compiler_params=compiler_params_2d,
        )(x2)
        return out2.reshape(out_shape)

    # ---- general case: 3-D (pre, red, post), reduce the middle axis ----
    x3 = x.reshape(pre, red, post)

    # Lane-dense last dim: full post, or a multiple-of-128 divisor up to 2048.
    tile_post = post if post <= 2048 else _pick_tile(post, 2048, 128)
    # Output-resident dim: modest, multiple of 8 (or full pre).
    tile_pre = _pick_tile(pre, 256, 8)
    # Reduced dim fills the remaining per-block budget; multiple of packing.
    max_red = max(1, budget_elems // max(1, tile_pre * tile_post))
    tile_red = _pick_tile(red, max_red, pack)

    grid = (pre // tile_pre, post // tile_post, red // tile_red)
    out2 = pl.pallas_call(
        _sum_mid_kernel,
        out_shape=jax.ShapeDtypeStruct((pre, post), out_dtype),
        grid=grid,
        in_specs=[
            pl.BlockSpec((tile_pre, tile_red, tile_post), lambda i, j, k: (i, k, j))
        ],
        out_specs=pl.BlockSpec((tile_pre, tile_post), lambda i, j, k: (i, j)),
        scratch_shapes=[pltpu.VMEM((tile_pre, tile_post), acc_dtype)],
        compiler_params=compiler_params_3d,
    )(x3)
    return out2.reshape(out_shape)


if __name__ == "__main__":
    key = jax.random.PRNGKey(0)
    # Small input consistent with a conv-style feature map (NCHW).
    x = jax.random.normal(key, (2, 4, 16, 16), dtype=jnp.float32)

    # Sum(dim=1): sum over channels -> (2, 16, 16)   [3-D mid-axis path]
    out = pallas_sum(x, 1)
    out = jax.block_until_ready(out)
    ref = jnp.sum(x, axis=1)
    assert out.shape == ref.shape, (out.shape, ref.shape)
    assert jnp.allclose(out, ref, atol=1e-5, rtol=1e-5), "mismatch vs reference (dim=1)"

    # Sum(dim=-1): sum over the last axis -> (2, 4, 16)   [lane-reduce path]
    out_last = pallas_sum(x, -1)
    out_last = jax.block_until_ready(out_last)
    ref_last = jnp.sum(x, axis=-1)
    assert out_last.shape == ref_last.shape, (out_last.shape, ref_last.shape)
    assert jnp.allclose(out_last, ref_last, atol=1e-5, rtol=1e-5), "mismatch vs reference (dim=-1)"

    print("KERNEL_OK")
</pallas_src>

<mosaic_0001>
module attributes {stable_mosaic.version = 11 : i64} {
  func.func @_sum_mid_kernel(%arg0: i32, %arg1: i32, %arg2: i32, %arg3: memref<2x4x256xf32, #tpu.memory_space<vmem>>, %arg4: memref<2x256xf32, #tpu.memory_space<vmem>>, %arg5: memref<2x256xf32, #tpu.memory_space<vmem>>) attributes {dimension_semantics = [#tpu.dimension_semantics<parallel>, #tpu.dimension_semantics<parallel>, #tpu.dimension_semantics<arbitrary>], iteration_bounds = array<i64: 1, 1, 1>, scalar_prefetch = 0 : i64, scratch_operands = 1 : i64, tpu.core_type = #tpu.core_type<tc>, window_params = [{transform_indices = @transform_0, window_bounds = array<i64: 2, 4, 256>}, {transform_indices = @transform_1, window_bounds = array<i64: 2, 256>}]} {
    %c0_i32 = arith.constant 0 : i32
    %0 = arith.cmpi eq, %arg2, %c0_i32 : i32
    %1 = arith.extui %0 : i1 to i32
    %c0_i32_0 = arith.constant 0 : i32
    %2 = arith.cmpi ne, %1, %c0_i32_0 : i32
    scf.if %2 {
      %cst_9 = arith.constant 0.000000e+00 : f32
      %11 = vector.broadcast %cst_9 : f32 to vector<2x256xf32>
      %c0_10 = arith.constant 0 : index
      %c0_11 = arith.constant 0 : index
      %12 = vector.load %arg5[%c0_10, %c0_11] : memref<2x256xf32, #tpu.memory_space<vmem>>, vector<2x256xf32>
      tpu.vector_store %arg5[%c0_10, %c0_11], %11 {strides = array<i32>} : memref<2x256xf32, #tpu.memory_space<vmem>>, vector<2x256xf32>,
    } else {
    }
    %c0 = arith.constant 0 : index
    %c0_1 = arith.constant 0 : index
    %3 = vector.load %arg5[%c0, %c0_1] : memref<2x256xf32, #tpu.memory_space<vmem>>, vector<2x256xf32>
    %c0_2 = arith.constant 0 : index
    %c0_3 = arith.constant 0 : index
    %c0_4 = arith.constant 0 : index
    %4 = vector.load %arg3[%c0_2, %c0_3, %c0_4] : memref<2x4x256xf32, #tpu.memory_space<vmem>>, vector<2x4x256xf32>
    %cst = arith.constant dense<0.000000e+00> : vector<2x256xf32>
    %5 = vector.multi_reduction <add>, %4, %cst [1] : vector<2x4x256xf32> to vector<2x256xf32>
    %6 = arith.addf %3, %5 : vector<2x256xf32>
    %c0_5 = arith.constant 0 : index
    %c0_6 = arith.constant 0 : index
    %7 = vector.load %arg5[%c0_5, %c0_6] : memref<2x256xf32, #tpu.memory_space<vmem>>, vector<2x256xf32>
    tpu.vector_store %arg5[%c0_5, %c0_6], %6 {strides = array<i32>} : memref<2x256xf32, #tpu.memory_space<vmem>>, vector<2x256xf32>,
    %c0_i32_7 = arith.constant 0 : i32
    %8 = arith.cmpi eq, %arg2, %c0_i32_7 : i32
    %9 = arith.extui %8 : i1 to i32
    %c0_i32_8 = arith.constant 0 : i32
    %10 = arith.cmpi ne, %9, %c0_i32_8 : i32
    scf.if %10 {
      %c0_9 = arith.constant 0 : index
      %c0_10 = arith.constant 0 : index
      %11 = vector.load %arg5[%c0_9, %c0_10] : memref<2x256xf32, #tpu.memory_space<vmem>>, vector<2x256xf32>
      %c0_11 = arith.constant 0 : index
      %c0_12 = arith.constant 0 : index
      %12 = vector.load %arg4[%c0_11, %c0_12] : memref<2x256xf32, #tpu.memory_space<vmem>>, vector<2x256xf32>
      tpu.vector_store %arg4[%c0_11, %c0_12], %11 {strides = array<i32>} : memref<2x256xf32, #tpu.memory_space<vmem>>, vector<2x256xf32>,
    } else {
    }
    return
  }
  func.func @transform_0(%arg0: i32, %arg1: i32, %arg2: i32) -> (i32, i32, i32) {
    %c0_i32 = arith.constant 0 : i32
    return %arg0, %arg2, %arg1 : i32, i32, i32
  }
  func.func @transform_1(%arg0: i32, %arg1: i32, %arg2: i32) -> (i32, i32) {
    %c0_i32 = arith.constant 0 : i32
    return %arg0, %arg1 : i32, i32
  }
}

</mosaic_0001>

<llo_original>
// kernel: pallas_sum.1
$region0: #{pallas_sum.1}
  #allocation0 [shape = 'u32[]', space=smem, size = 0x4, offset = 0x4, fixed_abs, tag = 'smem constant byte address 0x4 - core index']
  #allocation1 [shape = 'u32[144,128]{1,0:T(1,128)}', space=vmem, size = 0x12000, scoped, tag = 'internal scratch']
  #allocation2 [shape = 'f32[2,256]{1,0:T(2,128)}', space=vmem, size = 0x800, scoped, tag = 'scratch operand']
  %s0 = inlined_call_operand.vmem [shape: f32[2,4,256], index: 0, kind: input, shape index: {}]
  %s1 = inlined_call_operand.vmem [shape: f32[2,256], index: 1, kind: output, shape index: {}]
  %s2 = sld [smem:[#allocation0]]
  $region22: #{pallas_sum.1} parent=0
    _
  %s4 = ssub.s32 1, %s2
  %s5 = scalar_select 0, %s4, %s2
  // Predicated region
  $region2: #{pallas_sum.1} parent=0 // pred_check
    _
  $region3: #{pallas_sum.1} parent=0 // pred_check_branch
    %7 = sbr.rel (0) target = $region5
  $region4: #{pallas_sum.1} parent=0 // pred_region
    _
  $region5: #{pallas_sum.1} parent=0 // pred_fallthru
    _
  %p8 = scmp.eq.s32.totalorder 0, 0
  // Predicated region
  $region6: #{pallas_sum.1} parent=0 // pred_check
    %p9 = pneg %p8
  $region7: #{pallas_sum.1} parent=0 // pred_check_branch
    %11 = sbr.rel (%p9) target = $region9
  $region8: #{pallas_sum.1} parent=0 // pred_region
    %12 = vst [vmem:[#allocation2] sm:$0xf] 0.0
  $region9: #{pallas_sum.1} parent=0 // pred_fallthru
    _
  %v13 = vld [vmem:[#allocation2] sm:$0xf]
  %v14 = vld [vmem:[%s0] sm:$0xff]
  %v15 = vld [vmem:[%s0 + $0x8] sm:$0xff]
  %v18 = vcombine.high %v14, %v14
  %v19 = vcombine.high %v15, %v15
  %vm22 = vcmask 1043456
  %v23 = vsel %vm22, %v14, 0.0
  %v24 = vrot.slane %v23, 4
  %v25 = vadd.f32 %v23, %v24
  %v26 = vrot.slane %v25, 2
  %v27 = vadd.f32 %v25, %v26
  %v28 = vrot.slane %v27, 1
  %v29 = vadd.f32 %v27, %v28
  %v30 = vsel %vm22, %v18, 0.0
  %v31 = vrot.slane %v30, 4
  %v32 = vadd.f32 %v30, %v31
  %v33 = vrot.slane %v32, 2
  %v34 = vadd.f32 %v32, %v33
  %v35 = vrot.slane %v34, 1
  %v36 = vadd.f32 %v34, %v35
  %v37 = vsel %vm22, %v15, 0.0
  %v38 = vrot.slane %v37, 4
  %v39 = vadd.f32 %v37, %v38
  %v40 = vrot.slane %v39, 2
  %v41 = vadd.f32 %v39, %v40
  %v42 = vrot.slane %v41, 1
  %v43 = vadd.f32 %v41, %v42
  %v44 = vsel %vm22, %v19, 0.0
  %v45 = vrot.slane %v44, 4
  %v46 = vadd.f32 %v44, %v45
  %v47 = vrot.slane %v46, 2
  %v48 = vadd.f32 %v46, %v47
  %v49 = vrot.slane %v48, 1
  %v50 = vadd.f32 %v48, %v49
  %v55 = vcombine.low %v29, %v36
  %v57 = vunpack.c.l.s4 1983009808
  %v58 = vunpack.c.0.s8 %v57
  %v59 = vlaneseq
  %v60 = vshrl.u32 %v59, 7
  %v61 = vsub.s32 %v58, %v60
  %v62 = vrot.slane %v55, %v61
  %v63 = vcombine.low %v43, %v50
  %v65 = vunpack.c.l.s4 1983009808
  %v66 = vunpack.c.0.s8 %v65
  %v67 = vlaneseq
  %v68 = vshrl.u32 %v67, 7
  %v69 = vsub.s32 %v66, %v68
  %v70 = vrot.slane %v63, %v69
  %vm71 = vcmask 1044484
  %v72 = vsel %vm71, %v62, %v62
  %vm73 = vcmask 1046534
  %v74 = vsel %vm73, %v62, %v72
  %v75 = vrot.slane %v70, 7
  %vm76 = vcmask 1041409
  %v77 = vsel %vm76, %v75, %v74
  %vm78 = vcmask 1043459
  %v79 = vsel %vm78, %v75, %v77
  %vm80 = vcmask 1045509
  %v81 = vsel %vm80, %v75, %v79
  %vm82 = vcmask 1047559
  %v83 = vsel %vm82, %v75, %v81
  %v85 = vadd.f32 %v13, %v83
  %86 = vst [vmem:[#allocation2] sm:$0xf] %v85
  // Predicated region
  $region10: #{pallas_sum.1} parent=0 // pred_check
    %p87 = pneg %p8
  $region11: #{pallas_sum.1} parent=0 // pred_check_branch
    %89 = sbr.rel (%p87) target = $region13
  $region12: #{pallas_sum.1} parent=0 // pred_region
    %v90 = vld [vmem:[#allocation2] sm:$0xf]
    %91 = vst [vmem:[%s1] sm:$0xf] %v90
  $region13: #{pallas_sum.1} parent=0 // pred_fallthru
    _
  // Predicated region
  $region14: #{pallas_sum.1} parent=0 // pred_check
    _
  $region15: #{pallas_sum.1} parent=0 // pred_check_branch
    %93 = sbr.rel (0) target = $region17
  $region16: #{pallas_sum.1} parent=0 // pred_region
    _
  $region17: #{pallas_sum.1} parent=0 // pred_fallthru
    _
  // Predicated region
  $region18: #{pallas_sum.1} parent=0 // pred_check
    _
  $region19: #{pallas_sum.1} parent=0 // pred_check_branch
    %95 = sbr.rel (0) target = $region21
  $region20: #{pallas_sum.1} parent=0 // pred_region
    _
  $region21: #{pallas_sum.1} parent=0 // pred_fallthru
    _

</llo_original>
